<compile_context>
chip_gen: v7x
topology: tpu7x:2x2x1
jax: 0.10.0
libtpu: 0.0.40
codegen_flags: <defaults>
</compile_context>

<pallas_src>
import jax
import jax.numpy as jnp
from jax import lax
from jax.experimental import pallas as pl
from jax.experimental.pallas import tpu as pltpu


def _round_up(x, m):
    return (x + m - 1) // m * m


def _cdiv(a, b):
    return -(-a // b)


# ---------------------------------------------------------------- kernels ----
def _stats_kernel(x_ref, s_ref):
    """Pass A: accumulate global sum and sum-of-squares over all row tiles."""
    @pl.when(pl.program_id(0) == 0)
    def _():
        s_ref[0] = jnp.float32(0.0)
        s_ref[1] = jnp.float32(0.0)

    x = x_ref[...].astype(jnp.float32)
    s_ref[0] += jnp.sum(x)
    s_ref[1] += jnp.sum(x * x)


def _norm_kernel(stats_ref, x_ref, w_ref, b_ref, o_ref):
    """Pass B: (x - mean) * inv_std * weight + bias, all math in f32."""
    mean = stats_ref[0]
    inv_std = stats_ref[1]
    x = x_ref[...].astype(jnp.float32)
    w = w_ref[...].astype(jnp.float32)
    b = b_ref[...].astype(jnp.float32)
    o_ref[...] = ((x - mean) * inv_std * w + b).astype(o_ref.dtype)


# ---------------------------------------------------------------- wrapper ----
def layer_norm(x, weight, bias, eps=1e-12):
    """Matches the PyTorch module: global scalar mean, unbiased global variance,
    then per-feature affine (Weight/Bias broadcast over the last dim)."""
    size = weight.shape[0]
    assert x.shape[-1] == size
    orig_shape = x.shape
    n_elems = float(x.size)
    n_int = int(x.size)
    itemsize = jnp.dtype(x.dtype).itemsize

    # ---- lane-dense layout: fold F logical rows (width H) into one 128-lane row
    x2d = x.reshape(-1, size)
    rows = x2d.shape[0]
    if size < 128 and 128 % size == 0:
        fold = 128 // size
    else:
        fold = 1
    W = size * fold
    R = _cdiv(rows, fold)  # folded rows needed

    # ---- chip-aware tile sizing (halve tiles / VMEM limit on v7x: 64 MiB phys)
    try:
        kind = jax.devices()[0].device_kind.lower()
    except Exception:
        kind = ""
    is_v7 = "v7" in kind
    target_rows = max(8, ((512 if is_v7 else 1024) * 1024) // (W * 4))
    num_tiles = _cdiv(R, target_rows)
    tm = _round_up(_cdiv(R, num_tiles), 8)     # sublane-aligned row tile
    r_pad = num_tiles * tm
    vmem_limit = (32 if is_v7 else 64) * 1024 * 1024

    # ---- zero-pad (zeros are neutral for sum/sum-of-squares; padded rows are
    #      sliced off after the normalize pass), then fold to (r_pad, W).
    pad_logical = r_pad * fold - rows
    xp = jnp.pad(x2d, ((0, pad_logical), (0, 0))) if pad_logical else x2d
    xf = xp.reshape(r_pad, W)
    wf = jnp.tile(weight, fold).reshape(1, W)
    bf = jnp.tile(bias, fold).reshape(1, W)
    xf_bytes = int(r_pad) * int(W) * itemsize

    # NOTE: for tiny tensors (like the demo shape) this is pure launch overhead;
    # the structure only pays off at realistic sizes.

    # ---- pass A: global partial sums accumulated into a resident SMEM pair ----
    stats = pl.pallas_call(
        _stats_kernel,
        out_shape=jax.ShapeDtypeStruct((2,), jnp.float32),
        grid=(num_tiles,),
        in_specs=[pl.BlockSpec((tm, W), lambda i: (i, 0))],
        out_specs=pl.BlockSpec(memory_space=pltpu.MemorySpace.SMEM),
        compiler_params=pltpu.CompilerParams(
            dimension_semantics=("arbitrary",),   # reduction: sequential
            vmem_limit_bytes=vmem_limit,
        ),
        cost_estimate=pl.CostEstimate(
            flops=2 * n_int, transcendentals=0, bytes_accessed=xf_bytes),
    )(xf)

    # Tiny scalar epilogue: mean / unbiased variance / rsqrt (keeps torch semantics,
    # including NaN for a single-element tensor via the (n-1) divisor).
    s1 = stats[0]
    s2 = stats[1]
    mean = s1 / n_elems
    var = (s2 - s1 * s1 / n_elems) / (n_elems - 1.0)
    inv_std = lax.rsqrt(var + eps)
    mean_inv = jnp.stack([mean, inv_std]).astype(jnp.float32)

    # ---- pass B: normalize + affine, lane-dense tiles, parallel over rows ----
    out_f = pl.pallas_call(
        _norm_kernel,
        out_shape=jax.ShapeDtypeStruct((r_pad, W), x.dtype),
        grid=(num_tiles,),
        in_specs=[
            pl.BlockSpec(memory_space=pltpu.MemorySpace.SMEM),   # [mean, inv_std]
            pl.BlockSpec((tm, W), lambda i: (i, 0)),             # x tile
            pl.BlockSpec((1, W), lambda i: (0, 0)),              # folded weight
            pl.BlockSpec((1, W), lambda i: (0, 0)),              # folded bias
        ],
        out_specs=pl.BlockSpec((tm, W), lambda i: (i, 0)),
        compiler_params=pltpu.CompilerParams(
            dimension_semantics=("parallel",),    # independent row tiles
            vmem_limit_bytes=vmem_limit,
        ),
        cost_estimate=pl.CostEstimate(
            flops=3 * n_int, transcendentals=0, bytes_accessed=2 * xf_bytes),
    )(mean_inv, xf, wf, bf)

    # Unfold lanes back to (rows, H), drop padding, restore original shape.
    out2d = out_f.reshape(r_pad * fold, size)[:rows]
    return out2d.reshape(orig_shape)


if __name__ == "__main__":
    key = jax.random.PRNGKey(0)

    batch, seq, hidden = 2, 8, 32  # size = hidden = 32
    x = jax.random.normal(key, (batch, seq, hidden), dtype=jnp.float32)

    # Deterministic params matching nn.Parameter(torch.ones/zeros(size)).
    weight = jnp.ones((hidden,), dtype=jnp.float32)
    bias = jnp.zeros((hidden,), dtype=jnp.float32)

    out = layer_norm(x, weight, bias, eps=1e-12)
    out = jax.block_until_ready(out)

    # Pure-JAX reference (global mean, unbiased variance).
    xf = x.astype(jnp.float32)
    mean = jnp.mean(xf)
    var = jnp.sum((xf - mean) ** 2) / (xf.size - 1)
    ref = (xf - mean) / jnp.sqrt(var + 1e-12) * weight + bias
    assert jnp.allclose(out, ref, atol=1e-5, rtol=1e-5), "mismatch vs reference"

    print("KERNEL_OK")
</pallas_src>

<mosaic_0001>
module attributes {stable_mosaic.version = 11 : i64} {
  func.func @_stats_kernel(%arg0: i32, %arg1: memref<8x128xf32, #tpu.memory_space<vmem>>, %arg2: memref<2xf32, #tpu.memory_space<smem>>) attributes {dimension_semantics = [#tpu.dimension_semantics<arbitrary>], iteration_bounds = array<i64: 1>, scalar_prefetch = 0 : i64, scratch_operands = 0 : i64, tpu.core_type = #tpu.core_type<tc>, window_params = [{transform_indices = @transform_0, window_bounds = array<i64: 8, 128>}, {transform_indices = @transform_1, window_bounds = array<i64: 2>}]} {
    %c0_i32 = arith.constant 0 : i32
    %0 = arith.cmpi eq, %arg0, %c0_i32 : i32
    %1 = arith.extui %0 : i1 to i32
    %c0_i32_0 = arith.constant 0 : i32
    %2 = arith.cmpi ne, %1, %c0_i32_0 : i32
    scf.if %2 {
      %cst_6 = arith.constant 0.000000e+00 : f32
      %c0_7 = arith.constant 0 : index
      %19 = memref.load %arg2[%c0_7] : memref<2xf32, #tpu.memory_space<smem>>
      memref.store %cst_6, %arg2[%c0_7] : memref<2xf32, #tpu.memory_space<smem>>
      %cst_8 = arith.constant 0.000000e+00 : f32
      %c1_9 = arith.constant 1 : index
      %20 = memref.load %arg2[%c1_9] : memref<2xf32, #tpu.memory_space<smem>>
      memref.store %cst_8, %arg2[%c1_9] : memref<2xf32, #tpu.memory_space<smem>>
    } else {
    }
    %c0 = arith.constant 0 : index
    %c0_1 = arith.constant 0 : index
    %3 = vector.load %arg1[%c0, %c0_1] : memref<8x128xf32, #tpu.memory_space<vmem>>, vector<8x128xf32>
    %c0_2 = arith.constant 0 : index
    %4 = memref.load %arg2[%c0_2] : memref<2xf32, #tpu.memory_space<smem>>
    %5 = vector.shape_cast %3 : vector<8x128xf32> to vector<1x8x128xf32>
    %cst = arith.constant dense<0.000000e+00> : vector<1xf32>
    %6 = vector.multi_reduction <add>, %5, %cst [1, 2] : vector<1x8x128xf32> to vector<1xf32>
    %7 = vector.shape_cast %6 : vector<1xf32> to vector<1x1x1xf32>
    %8 = vector.extract %7[0, 0, 0] : f32 from vector<1x1x1xf32>
    %9 = arith.addf %4, %8 : f32
    %c0_3 = arith.constant 0 : index
    %10 = memref.load %arg2[%c0_3] : memref<2xf32, #tpu.memory_space<smem>>
    memref.store %9, %arg2[%c0_3] : memref<2xf32, #tpu.memory_space<smem>>
    %c1 = arith.constant 1 : index
    %11 = memref.load %arg2[%c1] : memref<2xf32, #tpu.memory_space<smem>>
    %12 = arith.mulf %3, %3 : vector<8x128xf32>
    %13 = vector.shape_cast %12 : vector<8x128xf32> to vector<1x8x128xf32>
    %cst_4 = arith.constant dense<0.000000e+00> : vector<1xf32>
    %14 = vector.multi_reduction <add>, %13, %cst_4 [1, 2] : vector<1x8x128xf32> to vector<1xf32>
    %15 = vector.shape_cast %14 : vector<1xf32> to vector<1x1x1xf32>
    %16 = vector.extract %15[0, 0, 0] : f32 from vector<1x1x1xf32>
    %17 = arith.addf %11, %16 : f32
    %c1_5 = arith.constant 1 : index
    %18 = memref.load %arg2[%c1_5] : memref<2xf32, #tpu.memory_space<smem>>
    memref.store %17, %arg2[%c1_5] : memref<2xf32, #tpu.memory_space<smem>>
    return
  }
  func.func @transform_0(%arg0: i32) -> (i32, i32) {
    %c0_i32 = arith.constant 0 : i32
    %c0_i32_0 = arith.constant 0 : i32
    return %arg0, %c0_i32 : i32, i32
  }
  func.func @transform_1(%arg0: i32) -> i32 {
    %c0_i32 = arith.constant 0 : i32
    %c0_i32_0 = arith.constant 0 : i32
    return %c0_i32 : i32
  }
}

</mosaic_0001>

<llo_original>
// kernel: tpu_custom_call.1
$region0: #{tpu_custom_call.1}
  #allocation0 [shape = 'u32[]', space=smem, size = 0x4, offset = 0x4, fixed_abs, tag = 'smem constant byte address 0x4 - core index']
  #allocation1 [shape = 'u32[144,128]{1,0:T(1,128)}', space=vmem, size = 0x12000, scoped, tag = 'internal scratch']
  %s0 = inlined_call_operand.hbm [shape: f32[8,128], index: 0, kind: input, shape index: {}]
  %s1 = inlined_call_operand.hbm [shape: f32[2], index: 1, kind: output, shape index: {}]
  %s2 = sld [smem:[#allocation0]]
  $region22: #{tpu_custom_call.1} parent=0
    _
  %s4 = ssub.s32 1, %s2
  %s5 = scalar_select 0, %s4, %s2
  $region1: #{tpu_custom_call.1} parent=0
    #allocation2 [shape = 'u8[4096]{0}', space=vmem, size = 0x1000, scoped, tag = 'input window, operand 0, single buffered']
    #allocation3 [shape = 's32[1]{0}', space=sflag, size = 0x4, scoped, tag = 'scoped memory for tpu_custom_call.1']
    #allocation4 [shape = 's32[1]{0}', space=sflag, size = 0x4, scoped, tag = 'scoped memory for tpu_custom_call.1']
    #allocation5 [shape = 'u8[512]{0}', space=smem, size = 0x200, scoped, tag = 'output window, operand 0, single buffered']
    %6 = vsyncpa [#allocation3], 0
    %7 = vsyncpa [#allocation4], 0
    // Predicated region
    $region2: #{tpu_custom_call.1} parent=1 // pred_check
      _
    $region3: #{tpu_custom_call.1} parent=1 // pred_check_branch
      %9 = sbr.rel (0) target = $region5
    $region4: #{tpu_custom_call.1} parent=1 // pred_region
      %s11 = ssub.s32 128, 128
      %12 = vsyncadd [#allocation3], %s11
      %s14 = sshll.u32 [#allocation2], 4
      %s15 = int_to_ptr.vmem [resolvable:$true] %s14
      %17 = dma.hbm_to_vmem [thread:$0]  %s0, 128, %s15, [#allocation3]
    $region5: #{tpu_custom_call.1} parent=1 // pred_fallthru
      _
    // Predicated region
    $region6: #{tpu_custom_call.1} parent=1 // pred_check
      _
    $region7: #{tpu_custom_call.1} parent=1 // pred_check_branch
      %19 = sbr.rel (0) target = $region9
    $region8: #{tpu_custom_call.1} parent=1 // pred_region
      %20 = dma.done [#allocation3], 128
    $region9: #{tpu_custom_call.1} parent=1 // pred_fallthru
      _
    %p21 = scmp.eq.s32.totalorder 0, 0
    // Predicated region
    $region10: #{tpu_custom_call.1} parent=1 // pred_check
      %p22 = pneg %p21
    $region11: #{tpu_custom_call.1} parent=1 // pred_check_branch
      %24 = sbr.rel (%p22) target = $region13
    $region12: #{tpu_custom_call.1} parent=1 // pred_region
      %s25 = scalar_lea.smem [#allocation5], 0
      %26 = sst [smem:[%s25]] 0.0
      %s27 = scalar_lea.smem [#allocation5], 1
      %28 = sst [smem:[%s27]] 0.0
    $region13: #{tpu_custom_call.1} parent=1 // pred_fallthru
      _
    %v29 = vld [vmem:[#allocation2] sm:$0xff]
    %s30 = sld [smem:[#allocation5]]
    %31 = vadd.xlane.f32.xlu0 %v29
    %v32 = vpop.xlane.xlu0 %31
    %v33 = vrot.slane %v32, 4
    %v34 = vadd.f32 %v32, %v33
    %v35 = vrot.slane %v34, 2
    %v36 = vadd.f32 %v34, %v35
    %v37 = vrot.slane %v36, 1
    %v38 = vadd.f32 %v36, %v37
    %s39 = vtos %v38
    %s40 = sadd.f32 %s30, %s39
    %s41 = scalar_lea.smem [#allocation5], 0
    %42 = sst [smem:[%s41]] %s40
    %s43 = sld [smem:[#allocation5 + $0x1]]
    %v44 = vmul.f32 %v29, %v29
    %45 = vadd.xlane.f32.xlu0 %v44
    %v46 = vpop.xlane.xlu0 %45
    %v47 = vrot.slane %v46, 4
    %v48 = vadd.f32 %v46, %v47
    %v49 = vrot.slane %v48, 2
    %v50 = vadd.f32 %v48, %v49
    %v51 = vrot.slane %v50, 1
    %v52 = vadd.f32 %v50, %v51
    %s53 = vtos %v52
    %s54 = sadd.f32 %s43, %s53
    %s55 = scalar_lea.smem [#allocation5], 1
    %56 = sst [smem:[%s55]] %s54
    // Predicated region
    $region14: #{tpu_custom_call.1} parent=1 // pred_check
      _
    $region15: #{tpu_custom_call.1} parent=1 // pred_check_branch
      %58 = sbr.rel (0) target = $region17
    $region16: #{tpu_custom_call.1} parent=1 // pred_region
      %s60 = ssub.s32 16, 16
      %61 = vsyncadd [#allocation4], %s60
      %64 = dma.smem_to_hbm [#allocation5], 16, %s1, [#allocation4]
    $region17: #{tpu_custom_call.1} parent=1 // pred_fallthru
      _
    // Predicated region
    $region18: #{tpu_custom_call.1} parent=1 // pred_check
      _
    $region19: #{tpu_custom_call.1} parent=1 // pred_check_branch
      %66 = sbr.rel (0) target = $region21
    $region20: #{tpu_custom_call.1} parent=1 // pred_region
      %67 = dma.done [#allocation4], 16
    $region21: #{tpu_custom_call.1} parent=1 // pred_fallthru
      _
    %68 = sfence
    %69 = vsyncpa [#allocation3], 1
    %70 = vsyncpa [#allocation4], 1

</llo_original>
